<compile_context>
chip_gen: v7x
topology: tpu7x:2x2x1
jax: 0.10.0
libtpu: 0.0.40
codegen_flags: <defaults>
</compile_context>

<pallas_src>
import functools

import numpy as np

import jax
import jax.numpy as jnp
from jax.experimental import pallas as pl
from jax.experimental.pallas import tpu as pltpu


def _linear_kernel(w_ref, b_ref, x_ref, ot_ref):
    """w_ref: (out_f, in_f); b_ref: (out_f, 1); x_ref: (tb, in_f);
    ot_ref: (out_f, tb). All VMEM."""
    # One MXU contraction: (out_f, in_f) . (tb, in_f)^T -> (out_f, tb).
    # Contracting dim 1 of both operands keeps the batch on the 128-wide lane
    # axis, so the store below is a full-width, unmasked vector store.
    yt = jax.lax.dot_general(
        w_ref[...], x_ref[...],
        dimension_numbers=(((1,), (1,)), ((), ())),
        preferred_element_type=jnp.float32,
    )
    ot_ref[...] = (yt + b_ref[...]).astype(ot_ref.dtype)


@functools.partial(jax.jit, static_argnames=("block_b",))
def simple_model_forward(x, weight, bias, *, block_b=8192):
    """x: (B, 10); weight: (2, 10) (PyTorch layout); bias: (2,). Returns (B, 2)."""
    B, in_f = x.shape
    out_f = weight.shape[0]

    if B <= block_b:
        tb = B                          # single block == full batch dim
    else:
        assert block_b % 128 == 0, "batch tile must be a multiple of 128 lanes"
        tb = block_b                    # ragged last block handled by Pallas

    grid = (pl.cdiv(B, tb),)

    # Real traffic only: one read of x, one write of y, plus the tiny params.
    cost = pl.CostEstimate(
        flops=2 * B * in_f * out_f,
        transcendentals=0,
        bytes_accessed=(B * in_f + B * out_f + out_f * in_f + out_f) * 4,
    )

    yt = pl.pallas_call(
        _linear_kernel,
        out_shape=jax.ShapeDtypeStruct((out_f, B), x.dtype),
        grid=grid,
        in_specs=[
            pl.BlockSpec((out_f, in_f), lambda i: (0, 0)),    # weight, VMEM-resident
            pl.BlockSpec((out_f, 1), lambda i: (0, 0)),       # bias,   VMEM-resident
            pl.BlockSpec((tb, in_f), lambda i: (i, 0)),       # x tile (pipelined)
        ],
        out_specs=pl.BlockSpec((out_f, tb), lambda i: (0, i)),  # lane-dense yT tile
        compiler_params=pltpu.CompilerParams(
            dimension_semantics=("parallel",),                # megacore on v7x
            vmem_limit_bytes=32 * 1024 * 1024,                # explicit, portable cap
        ),
        cost_estimate=cost,
    )(weight, bias.reshape(out_f, 1), x)

    return yt.T                                               # (B, out_f)


if __name__ == "__main__":
    key = jax.random.PRNGKey(0)
    kx, kw, kb, kx2 = jax.random.split(key, 4)

    B, IN, OUT = 8, 10, 2
    x = jax.random.normal(kx, (B, IN), dtype=jnp.float32)

    # Deterministic params (mimics nn.Linear's U(-1/sqrt(in_f), 1/sqrt(in_f))).
    bound = 1.0 / float(np.sqrt(IN))
    weight = jax.random.uniform(kw, (OUT, IN), minval=-bound, maxval=bound,
                                dtype=jnp.float32)
    bias = jax.random.uniform(kb, (OUT,), minval=-bound, maxval=bound,
                              dtype=jnp.float32)

    # Exact host-side reference (avoids TPU XLA's own bf16-pass dot rounding).
    def ref(xv):
        return np.asarray(xv) @ np.asarray(weight).T + np.asarray(bias)

    # Tolerance covers worst-case MXU bf16-pass rounding while still catching
    # any layout / indexing bug (which would produce O(1) errors).
    ATOL = RTOL = 5e-3

    # Small-batch path (single block, block shape == full array dims).
    y = jax.block_until_ready(simple_model_forward(x, weight, bias))
    assert y.shape == (B, OUT)
    assert np.allclose(np.asarray(y), ref(x), atol=ATOL, rtol=RTOL)

    # Larger batch: multi-step pipelined grid with a ragged last block.
    B2 = 1300
    x2 = jax.random.normal(kx2, (B2, IN), dtype=jnp.float32)
    y2 = jax.block_until_ready(simple_model_forward(x2, weight, bias, block_b=512))
    assert y2.shape == (B2, OUT)
    assert np.allclose(np.asarray(y2), ref(x2), atol=ATOL, rtol=RTOL)

    print("KERNEL_OK")
</pallas_src>

<mosaic_0001>
module attributes {stable_mosaic.version = 11 : i64} {
  func.func @_linear_kernel(%arg0: i32, %arg1: memref<2x10xf32, #tpu.memory_space<vmem>>, %arg2: memref<2x1xf32, #tpu.memory_space<vmem>>, %arg3: memref<8x10xf32, #tpu.memory_space<vmem>>, %arg4: memref<2x8xf32, #tpu.memory_space<vmem>>) attributes {dimension_semantics = [#tpu.dimension_semantics<parallel>], iteration_bounds = array<i64: 1>, scalar_prefetch = 0 : i64, scratch_operands = 0 : i64, tpu.core_type = #tpu.core_type<tc>, window_params = [{pipeline_mode = #tpu.pipeline_mode<synchronous>, transform_indices = @transform_0, window_bounds = array<i64: 2, 10>}, {pipeline_mode = #tpu.pipeline_mode<synchronous>, transform_indices = @transform_1, window_bounds = array<i64: 2, 1>}, {transform_indices = @transform_2, window_bounds = array<i64: 8, 10>}, {transform_indices = @transform_3, window_bounds = array<i64: 2, 8>}]} {
    %c0 = arith.constant 0 : index
    %c0_0 = arith.constant 0 : index
    %0 = vector.load %arg1[%c0, %c0_0] : memref<2x10xf32, #tpu.memory_space<vmem>>, vector<2x10xf32>
    %c0_1 = arith.constant 0 : index
    %c0_2 = arith.constant 0 : index
    %1 = vector.load %arg3[%c0_1, %c0_2] : memref<8x10xf32, #tpu.memory_space<vmem>>, vector<8x10xf32>
    %cst = arith.constant dense<0.000000e+00> : vector<2x8xf32>
    %2 = tpu.matmul %0, %1, %cst {dimension_numbers = #tpu.dot_dimension_numbers<[1], [1], [0], [0], [0, 0, 1, 0], [], []>} : vector<2x10xf32>, vector<8x10xf32>, vector<2x8xf32> -> vector<2x8xf32>
    %c0_3 = arith.constant 0 : index
    %c0_4 = arith.constant 0 : index
    %3 = vector.load %arg2[%c0_3, %c0_4] : memref<2x1xf32, #tpu.memory_space<vmem>>, vector<2x1xf32>
    %4 = vector.broadcast %3 : vector<2x1xf32> to vector<2x8xf32>
    %5 = arith.addf %2, %4 : vector<2x8xf32>
    %c0_5 = arith.constant 0 : index
    %c0_6 = arith.constant 0 : index
    %6 = vector.load %arg4[%c0_5, %c0_6] : memref<2x8xf32, #tpu.memory_space<vmem>>, vector<2x8xf32>
    tpu.vector_store %arg4[%c0_5, %c0_6], %5 {strides = array<i32>} : memref<2x8xf32, #tpu.memory_space<vmem>>, vector<2x8xf32>,
    return
  }
  func.func @transform_0(%arg0: i32) -> (i32, i32) {
    %c0_i32 = arith.constant 0 : i32
    %c0_i32_0 = arith.constant 0 : i32
    %c0_i32_1 = arith.constant 0 : i32
    return %c0_i32, %c0_i32_0 : i32, i32
  }
  func.func @transform_1(%arg0: i32) -> (i32, i32) {
    %c0_i32 = arith.constant 0 : i32
    %c0_i32_0 = arith.constant 0 : i32
    %c0_i32_1 = arith.constant 0 : i32
    return %c0_i32, %c0_i32_0 : i32, i32
  }
  func.func @transform_2(%arg0: i32) -> (i32, i32) {
    %c0_i32 = arith.constant 0 : i32
    %c0_i32_0 = arith.constant 0 : i32
    return %arg0, %c0_i32 : i32, i32
  }
  func.func @transform_3(%arg0: i32) -> (i32, i32) {
    %c0_i32 = arith.constant 0 : i32
    %c0_i32_0 = arith.constant 0 : i32
    return %c0_i32, %arg0 : i32, i32
  }
}

</mosaic_0001>

<llo_original>
// kernel: simple_model_forward.1
$region0: #{simple_model_forward.1}
  #allocation0 [shape = 'u32[]', space=smem, size = 0x4, offset = 0x4, fixed_abs, tag = 'smem constant byte address 0x4 - core index']
  #allocation1 [shape = 'u32[144,128]{1,0:T(1,128)}', space=vmem, size = 0x12000, scoped, tag = 'internal scratch']
  %s0 = inlined_call_operand.vmem [shape: f32[2,10], index: 0, kind: input, shape index: {}]
  %s1 = inlined_call_operand.vmem [shape: f32[2,1], index: 1, kind: input, shape index: {}]
  %s2 = inlined_call_operand.hbm [shape: f32[8,10], index: 2, kind: input, shape index: {}]
  %s3 = inlined_call_operand.hbm [shape: f32[2,8], index: 3, kind: output, shape index: {}]
  %s4 = sld [smem:[#allocation0]]
  $region26: #{simple_model_forward.1} parent=0
    _
  %s6 = ssub.s32 1, %s4
  %s7 = scalar_select 0, %s6, %s4
  $region1: #{simple_model_forward.1} parent=0
    #allocation2 [shape = 'u8[4096]{0}', space=vmem, size = 0x1000, scoped, tag = 'input window, operand 2, single buffered']
    #allocation3 [shape = 's32[1]{0}', space=sflag, size = 0x4, scoped, tag = 'scoped memory for simple_model_forward.1']
    #allocation4 [shape = 's32[1]{0}', space=sflag, size = 0x4, scoped, tag = 'scoped memory for simple_model_forward.1']
    #allocation5 [shape = 'u8[1024]{0}', space=vmem, size = 0x400, scoped, tag = 'output window, operand 0, single buffered']
    %8 = vsyncpa [#allocation3], 0
    %9 = vsyncpa [#allocation4], 0
    // Predicated region
    $region2: #{simple_model_forward.1} parent=1 // pred_check
      _
    $region3: #{simple_model_forward.1} parent=1 // pred_check_branch
      %11 = sbr.rel (0) target = $region5
    $region4: #{simple_model_forward.1} parent=1 // pred_region
      _
    $region5: #{simple_model_forward.1} parent=1 // pred_fallthru
      _
    // Predicated region
    $region6: #{simple_model_forward.1} parent=1 // pred_check
      _
    $region7: #{simple_model_forward.1} parent=1 // pred_check_branch
      %13 = sbr.rel (0) target = $region9
    $region8: #{simple_model_forward.1} parent=1 // pred_region
      _
    $region9: #{simple_model_forward.1} parent=1 // pred_fallthru
      _
    // Predicated region
    $region10: #{simple_model_forward.1} parent=1 // pred_check
      _
    $region11: #{simple_model_forward.1} parent=1 // pred_check_branch
      %15 = sbr.rel (0) target = $region13
    $region12: #{simple_model_forward.1} parent=1 // pred_region
      %s17 = ssub.s32 128, 128
      %18 = vsyncadd [#allocation3], %s17
      %s20 = sshll.u32 [#allocation2], 4
      %s21 = int_to_ptr.vmem [resolvable:$true] %s20
      %23 = dma.hbm_to_vmem [thread:$0]  %s2, 128, %s21, [#allocation3]
    $region13: #{simple_model_forward.1} parent=1 // pred_fallthru
      _
    // Predicated region
    $region14: #{simple_model_forward.1} parent=1 // pred_check
      _
    $region15: #{simple_model_forward.1} parent=1 // pred_check_branch
      %25 = sbr.rel (0) target = $region17
    $region16: #{simple_model_forward.1} parent=1 // pred_region
      %26 = dma.done [#allocation3], 128
    $region17: #{simple_model_forward.1} parent=1 // pred_fallthru
      _
    %v27 = vld [vmem:[%s0] sm:$0x3]
    %v28 = vld [vmem:[#allocation2] sm:$0xff]
    %v29 = vld [vmem:[%s1] sm:$0x3]
    %31 = vset.pattern.permute.xlu0 0
    %32 = vperm.xlu0 %31, %v29
    %v33 = vpop.permute.xlu0 %32
    %vm35 = vcmask 80896
    %v37 = vsel %vm35, %v27, 0
    %v40 = vsel %vm35, %v28, 0
    %42 = vmatprep.subr.mxu0 0.0
    %43 = vmatpush1.xpose.msra.mxu0 %v40
    %44 = vmatprep.subr.mxu0 0.0
    %45 = vmatpush1.xpose.msra.mxu0 0.0
    %46 = vmatprep.subr.mxu0 0.0
    %47 = vmatpush1.xpose.msra.mxu0 0.0
    %48 = vmatprep.subr.mxu0 0.0
    %49 = vmatpush1.xpose.msra.mxu0 0.0
    %50 = vmatprep.subr.mxu0 0.0
    %51 = vmatpush1.xpose.msra.mxu0 0.0
    %52 = vmatprep.subr.mxu0 0.0
    %53 = vmatpush1.xpose.msra.mxu0 0.0
    %54 = vmatprep.subr.mxu0 0.0
    %55 = vmatpush1.xpose.msra.mxu0 0.0
    %56 = vmatprep.subr.mxu0 0.0
    %57 = vmatpush1.xpose.msra.mxu0 0.0
    %58 = vmatprep.subr.mxu0 0.0
    %59 = vmatpush1.xpose.msra.mxu0 0.0
    %60 = vmatprep.subr.mxu0 0.0
    %61 = vmatpush1.xpose.msra.mxu0 0.0
    %62 = vmatprep.subr.mxu0 0.0
    %63 = vmatpush1.xpose.msra.mxu0 0.0
    %64 = vmatprep.subr.mxu0 0.0
    %65 = vmatpush1.xpose.msra.mxu0 0.0
    %66 = vmatprep.subr.mxu0 0.0
    %67 = vmatpush1.xpose.msra.mxu0 0.0
    %68 = vmatprep.subr.mxu0 0.0
    %69 = vmatpush1.xpose.msra.mxu0 0.0
    %70 = vmatprep.subr.mxu0 0.0
    %71 = vmatpush1.xpose.msra.mxu0 0.0
    %72 = vmatprep.subr.mxu0 0.0
    %73 = vmatpush1.xpose.msra.mxu0 0.0
    %74 = vmatprep.subr.mxu0 0.0
    %75 = vmatpush1.xpose.msra.mxu0 0.0
    %76 = vmatprep.subr.mxu0 0.0
    %77 = vmatpush1.xpose.msra.mxu0 0.0
    %78 = vmatprep.subr.mxu0 0.0
    %79 = vmatpush1.xpose.msra.mxu0 0.0
    %80 = vmatprep.subr.mxu0 0.0
    %81 = vmatpush1.xpose.msra.mxu0 0.0
    %82 = vmatprep.subr.mxu0 0.0
    %83 = vmatpush1.xpose.msra.mxu0 0.0
    %84 = vmatprep.subr.mxu0 0.0
    %85 = vmatpush1.xpose.msra.mxu0 0.0
    %86 = vmatprep.subr.mxu0 0.0
    %87 = vmatpush1.xpose.msra.mxu0 0.0
    %88 = vmatprep.subr.mxu0 0.0
    %89 = vmatpush1.xpose.msra.mxu0 0.0
    %90 = vmatprep.subr.mxu0 0.0
    %91 = vmatpush1.xpose.msra.mxu0 0.0
    %92 = vmatprep.subr.mxu0 0.0
    %93 = vmatpush1.xpose.msra.mxu0 0.0
    %94 = vmatprep.subr.mxu0 0.0
    %95 = vmatpush1.xpose.msra.mxu0 0.0
    %96 = vmatprep.subr.mxu0 0.0
    %97 = vmatpush1.xpose.msra.mxu0 0.0
    %98 = vmatprep.subr.mxu0 0.0
    %99 = vmatpush1.xpose.msra.mxu0 0.0
    %100 = vmatprep.subr.mxu0 0.0
    %101 = vmatpush1.xpose.msra.mxu0 0.0
    %102 = vmatprep.subr.mxu0 0.0
    %103 = vmatpush1.xpose.msra.mxu0 0.0
    %104 = vmatprep.subr.mxu0 0.0
    %105 = vmatpush1.xpose.msra.mxu0 0.0
    %106 = vmatprep.mubr.f32.mxu0 0.0
    %107 = vmatmul.mubr.f32.gmra.mrb[0].mxu0 %v37
    %v108 = vpop.f32.mrb[0].mxu0
    %v109 = vadd.f32 %v33, %v108
    %v110 = vpop.f32.mrb[0].mxu0
    %111 = vdwg.mxu0
    %vm112 = vcmask 58368
    %113 = vst.msk [vmem:[#allocation5] sm:$0x3] %vm112, %v109
    // Predicated region
    $region18: #{simple_model_forward.1} parent=1 // pred_check
      _
    $region19: #{simple_model_forward.1} parent=1 // pred_check_branch
      %115 = sbr.rel (0) target = $region21
    $region20: #{simple_model_forward.1} parent=1 // pred_region
      %s117 = ssub.s32 32, 32
      %118 = vsyncadd [#allocation4], %s117
      %s120 = sshll.u32 [#allocation5], 4
      %s121 = int_to_ptr.vmem [resolvable:$true] %s120
      %123 = dma.vmem_to_hbm [thread:$0]  %s121, 32, %s3, [#allocation4]
    $region21: #{simple_model_forward.1} parent=1 // pred_fallthru
      _
    // Predicated region
    $region22: #{simple_model_forward.1} parent=1 // pred_check
      _
    $region23: #{simple_model_forward.1} parent=1 // pred_check_branch
      %125 = sbr.rel (0) target = $region25
    $region24: #{simple_model_forward.1} parent=1 // pred_region
      %126 = dma.done [#allocation4], 32
    $region25: #{simple_model_forward.1} parent=1 // pred_fallthru
      _
    %127 = vsyncpa [#allocation3], 1
    %128 = vsyncpa [#allocation4], 1

</llo_original>
